<compile_context>
chip_gen: v5e
topology: v5e:2x2
jax: 0.10.0
libtpu: 0.0.40
codegen_flags: <defaults>
</compile_context>

<pallas_src>
import functools

import jax
import jax.numpy as jnp
from jax.experimental import pallas as pl
from jax.experimental.pallas import tpu as pltpu


# ---------------------------------------------------------------------------
# Kernel
# ---------------------------------------------------------------------------
def _attention_kernel(q_ref, k_ref, v_ref,
                      wq_ref, bq_ref, wk_ref, bk_ref, wv_ref, bv_ref,
                      o_ref,
                      qp_sc, m_sc, l_sc, acc_sc,
                      *, tb, sq, tsk, out_dim, compute_dtype, exp_dtype):
    """Grid = (batch tiles, Sk tiles); flash-style online softmax over Sk."""
    sk_idx = pl.program_id(1)

    @pl.when(sk_idx == 0)
    def _init():
        # Project the query tile once per batch tile (its index_map is
        # Sk-invariant) and reset the online-softmax state.
        dq = q_ref.shape[-1]
        xq = q_ref[...].reshape(tb * sq, dq).astype(compute_dtype)
        q_p = jnp.dot(xq, wq_ref[...],
                      preferred_element_type=jnp.float32) + bq_ref[...]
        qp_sc[...] = q_p.reshape(tb, sq, out_dim).astype(compute_dtype)
        m_sc[...] = jnp.full_like(m_sc[...], -jnp.inf)
        l_sc[...] = jnp.zeros_like(l_sc[...])
        acc_sc[...] = jnp.zeros_like(acc_sc[...])

    # K/V projections for the current Sk tile.  Batch is folded into the MXU
    # M dimension; operands cast to compute_dtype in-kernel (no wrapper-side
    # pre-cast pass); accumulation in f32; biases stay f32.
    dk = k_ref.shape[-1]
    dv = v_ref.shape[-1]
    xk = k_ref[...].reshape(tb * tsk, dk).astype(compute_dtype)
    xv = v_ref[...].reshape(tb * tsk, dv).astype(compute_dtype)
    k_p = jnp.dot(xk, wk_ref[...],
                  preferred_element_type=jnp.float32) + bk_ref[...]
    v_p = jnp.dot(xv, wv_ref[...],
                  preferred_element_type=jnp.float32) + bv_ref[...]
    k_b = k_p.reshape(tb, tsk, out_dim).astype(compute_dtype)
    v_b = v_p.reshape(tb, tsk, out_dim).astype(compute_dtype)

    # scores: contract the last dims directly (no explicit k^T transpose).
    scores = jax.lax.dot_general(
        qp_sc[...], k_b,
        dimension_numbers=(((2,), (2,)), ((0,), (0,))),
        preferred_element_type=jnp.float32)               # (TB, Sq, TSk) f32

    # Online softmax update (state kept in f32).
    m_prev = m_sc[...]
    m_new = jnp.maximum(m_prev, jnp.max(scores, axis=-1, keepdims=True))
    alpha = jnp.exp(m_prev - m_new)                       # (TB, Sq, 1) f32
    # exp in exp_dtype: bf16 doubles EUP throughput on v6e/v7x (arguments are
    # in (-inf, 0]); keep the default f32 on v5e.  Sums stay f32.
    p = jnp.exp((scores - m_new).astype(exp_dtype)).astype(jnp.float32)
    l_sc[...] = alpha * l_sc[...] + jnp.sum(p, axis=-1, keepdims=True)
    acc_sc[...] = alpha * acc_sc[...] + jax.lax.dot_general(
        p.astype(compute_dtype), v_b,
        dimension_numbers=(((2,), (1,)), ((0,), (0,))),
        preferred_element_type=jnp.float32)
    m_sc[...] = m_new

    @pl.when(sk_idx == pl.num_programs(1) - 1)
    def _finalize():
        inv_l = pl.reciprocal(l_sc[...], approx=True)     # EUP slot
        o_ref[...] = (acc_sc[...] * inv_l).astype(o_ref.dtype)


# ---------------------------------------------------------------------------
# Tiling / VMEM heuristics
# ---------------------------------------------------------------------------
def _round_up(x, m):
    return (x + m - 1) // m * m


def _tile_bytes(rows, cols, itemsize):
    # VMEM tiles are (8 sublanes, 128 lanes); pad both trailing dims.
    return _round_up(rows, 8) * _round_up(cols, 128) * itemsize


def _vmem_budget_bytes():
    """~80% of per-core VMEM (leaves Mosaic internal-scratch headroom):
    ~51 MiB on v7x (64 MiB/TC), ~102 MiB on v5e/v6e (128 MiB)."""
    cap = 128 * 2 ** 20
    try:
        info = pltpu.get_tpu_info()
        cap = int(getattr(info, "vmem_capacity_bytes", cap) or cap)
    except Exception:
        pass
    return int(cap * 0.8)


def _vmem_estimate(tb, sq, tsk, dq, dk, dv, o, act_bytes, cmp_bytes, out_bytes):
    f32 = 4
    est = 0
    # Double-buffered pipelined blocks (activations stream in the HBM dtype).
    est += 2 * tb * _tile_bytes(sq, dq, act_bytes)                       # q
    est += 2 * tb * (_tile_bytes(tsk, dk, act_bytes)
                     + _tile_bytes(tsk, dv, act_bytes))                  # k, v
    est += 2 * tb * _tile_bytes(sq, o, out_bytes)                        # out
    # Grid-invariant weights / biases (still double-buffered by default).
    est += 2 * (_tile_bytes(dq, o, cmp_bytes) + _tile_bytes(dk, o, cmp_bytes)
                + _tile_bytes(dv, o, cmp_bytes) + 3 * _tile_bytes(1, o, f32))
    # Persistent scratch: projected q, flash m / l / acc.
    est += tb * (_tile_bytes(sq, o, cmp_bytes) + _tile_bytes(sq, o, f32)
                 + 2 * _tile_bytes(sq, 1, f32))
    # Live in-kernel intermediates: projected k/v tiles, scores/p, ctx update.
    est += 2 * tb * _tile_bytes(tsk, o, f32)
    est += 3 * tb * _tile_bytes(sq, tsk, f32)
    est += tb * _tile_bytes(sq, o, f32)
    return est


def _pick_tb(batch, sq, target_rows):
    """Batch rows folded per grid step.

    Preference order: (1) grid has >= 2 steps (double-buffered DMA overlap),
    (2) an even number of steps (v7x megacore shards the parallel axis across
    2 TensorCores), (3) TB*Sq <= target_rows, (4) the largest such TB
    (amortizes per-step overhead and MXU push/drain)."""
    best, best_key = 1, None
    for tb in range(1, batch + 1):
        if batch % tb:
            continue
        nb = batch // tb
        rows = tb * sq
        key = ((nb >= 2) or (batch == 1),
               (nb % 2 == 0) or (nb == 1),
               rows <= target_rows,
               rows if rows <= target_rows else -rows)
        if best_key is None or key > best_key:
            best, best_key = tb, key
    return best


def _pick_tsk(sk, max_sk_tile):
    """Sk tile: prefer an 8-multiple divisor of Sk <= max_sk_tile (keeps the
    in-kernel (TB,TSk,D)->(TB*TSk,D) reshape layout-free and the block legal);
    fall back to the full Sk (untiled) when no clean tile exists."""
    if sk <= max_sk_tile:
        return sk
    for t in range(min(max_sk_tile, sk), 7, -1):
        if sk % t == 0 and t % 8 == 0:
            return t
    return sk


# ---------------------------------------------------------------------------
# Wrapper
# ---------------------------------------------------------------------------
def attention_forward(query, keys, values, params, *,
                      compute_dtype=jnp.float32,
                      exp_dtype=jnp.float32,
                      out_dtype=None,
                      target_rows=512,
                      max_sk_tile=512):
    """query: (B, Sq, Dq), keys: (B, Sk, Dk), values: (B, Sk, Dv) -> (B, Sq, O).

    compute_dtype=jnp.bfloat16 is valid on every generation (v5e's MXU is
    bf16-native; softmax math and all accumulation stay f32) and halves the
    weight DMA bytes.  exp_dtype=jnp.bfloat16 additionally doubles the EUP
    exp throughput on v6e/v7x (keep f32 on v5e).  out_dtype=jnp.bfloat16
    halves output writeback bytes if the consumer accepts it.
    """
    wq, bq, wk, bk, wv, bv = params
    B, Sq, Dq = query.shape
    _, Sk, Dk = keys.shape
    _, _, Dv = values.shape
    O = wq.shape[1]
    out_dtype = query.dtype if out_dtype is None else out_dtype

    act_bytes = jnp.dtype(query.dtype).itemsize
    cmp_bytes = jnp.dtype(compute_dtype).itemsize
    out_bytes = jnp.dtype(out_dtype).itemsize

    budget = _vmem_budget_bytes()
    tsk = _pick_tsk(Sk, max_sk_tile)
    tb = _pick_tb(B, Sq, target_rows)
    est = _vmem_estimate(tb, Sq, tsk, Dq, Dk, Dv, O,
                         act_bytes, cmp_bytes, out_bytes)
    # Shrink tiles until the working set fits the per-core budget (bounds the
    # TB*Sq*TSk f32 softmax intermediates — the first thing to blow v7x VMEM).
    while est > budget:
        new_tsk = _pick_tsk(Sk, max(8, tsk // 2)) if tsk > 8 else tsk
        if new_tsk < tsk:
            tsk = new_tsk
        elif tb > 1:
            tb = max(d for d in range(1, tb) if B % d == 0)
        else:
            break
        est = _vmem_estimate(tb, Sq, tsk, Dq, Dk, Dv, O,
                             act_bytes, cmp_bytes, out_bytes)
    nb, nks = B // tb, Sk // tsk

    # Weights are tiny & grid-invariant: cast once outside.  Activations are
    # NOT pre-cast (the kernel casts right before the dots).
    wq_c, wk_c, wv_c = (w.astype(compute_dtype) for w in (wq, wk, wv))
    bq2, bk2, bv2 = (b.reshape(1, O).astype(jnp.float32) for b in (bq, bk, bv))

    kernel = functools.partial(
        _attention_kernel, tb=tb, sq=Sq, tsk=tsk, out_dim=O,
        compute_dtype=compute_dtype, exp_dtype=exp_dtype)

    in_specs = [
        pl.BlockSpec((tb, Sq, Dq), lambda b, s: (b, 0, 0)),
        pl.BlockSpec((tb, tsk, Dk), lambda b, s: (b, s, 0)),
        pl.BlockSpec((tb, tsk, Dv), lambda b, s: (b, s, 0)),
        pl.BlockSpec((Dq, O), lambda b, s: (0, 0)),
        pl.BlockSpec((1, O), lambda b, s: (0, 0)),
        pl.BlockSpec((Dk, O), lambda b, s: (0, 0)),
        pl.BlockSpec((1, O), lambda b, s: (0, 0)),
        pl.BlockSpec((Dv, O), lambda b, s: (0, 0)),
        pl.BlockSpec((1, O), lambda b, s: (0, 0)),
    ]
    # 3-D output block: same index across the Sk axis (resident accumulator),
    # written only at the final Sk step.
    out_specs = pl.BlockSpec((tb, Sq, O), lambda b, s: (b, 0, 0))

    return pl.pallas_call(
        kernel,
        out_shape=jax.ShapeDtypeStruct((B, Sq, O), out_dtype),
        grid_spec=pltpu.PrefetchScalarGridSpec(
            num_scalar_prefetch=0,
            grid=(nb, nks),
            in_specs=in_specs,
            out_specs=out_specs,
            scratch_shapes=[
                pltpu.VMEM((tb, Sq, O), compute_dtype),   # projected q
                pltpu.VMEM((tb, Sq, 1), jnp.float32),     # running max m
                pltpu.VMEM((tb, Sq, 1), jnp.float32),     # running sum l
                pltpu.VMEM((tb, Sq, O), jnp.float32),     # unnormalized acc
            ]),
        compiler_params=pltpu.CompilerParams(
            dimension_semantics=("parallel", "arbitrary"),
            vmem_limit_bytes=int(min(max(2 * est, 16 * 2 ** 20), budget)),
        ),
    )(query, keys, values, wq_c, bq2, wk_c, bk2, wv_c, bv2)


# ---------------------------------------------------------------------------
# Params / reference
# ---------------------------------------------------------------------------
def init_params(key, query_dim, key_dim, value_dim, output_dim):
    """nn.Linear-style init (uniform +/- 1/sqrt(fan_in)); weights (in, out)."""
    ks = jax.random.split(key, 6)

    def linear(kw, kb, fan_in, fan_out):
        bound = 1.0 / jnp.sqrt(fan_in)
        w = jax.random.uniform(kw, (fan_in, fan_out), jnp.float32, -bound, bound)
        b = jax.random.uniform(kb, (1, fan_out), jnp.float32, -bound, bound)
        return w, b

    wq, bq = linear(ks[0], ks[1], query_dim, output_dim)
    wk, bk = linear(ks[2], ks[3], key_dim, output_dim)
    wv, bv = linear(ks[4], ks[5], value_dim, output_dim)
    return (wq, bq, wk, bk, wv, bv)


def reference_forward(query, keys, values, params):
    """Plain-JAX reference mirroring the PyTorch module."""
    wq, bq, wk, bk, wv, bv = params
    q_p = query @ wq + bq
    k_p = keys @ wk + bk
    v_p = values @ wv + bv
    scores = jnp.einsum("bqd,bkd->bqk", q_p, k_p)
    attn = jax.nn.softmax(scores, axis=-1)
    return jnp.einsum("bqk,bkd->bqd", attn, v_p)


if __name__ == "__main__":
    # Small shapes consistent with the module's forward signature; Sk=16 so
    # the Sk-tiled (online-softmax) path can be exercised with TSk=8.
    B, Sq, Sk = 4, 8, 16
    query_dim, key_dim, value_dim, output_dim = 16, 16, 16, 32

    root = jax.random.PRNGKey(0)
    k_params, k_q, k_k, k_v = jax.random.split(root, 4)

    params = init_params(k_params, query_dim, key_dim, value_dim, output_dim)
    query = jax.random.normal(k_q, (B, Sq, query_dim), jnp.float32)
    keys = jax.random.normal(k_k, (B, Sk, key_dim), jnp.float32)
    values = jax.random.normal(k_v, (B, Sk, value_dim), jnp.float32)

    ref = reference_forward(query, keys, values, params)

    # (1) f32 path with the Sk axis force-tiled: 2x2 grid (nb=2 batch tiles,
    #     nks=2 Sk tiles) exercises pipelining + the flash accumulator.
    #     Tolerance covers the approx (EUP) reciprocal in the softmax.
    out = attention_forward(query, keys, values, params, max_sk_tile=8)
    out = jax.block_until_ready(out)
    assert out.shape == (B, Sq, output_dim)
    assert jnp.allclose(out, ref, atol=1e-2, rtol=1e-2), "f32 mismatch vs ref"

    # (2) bf16 MXU operands (valid on v5e too: only matmul inputs are bf16,
    #     softmax math and accumulation stay f32); looser tolerance.
    out_bf16 = attention_forward(query, keys, values, params,
                                 compute_dtype=jnp.bfloat16)
    out_bf16 = jax.block_until_ready(out_bf16)
    assert out_bf16.shape == (B, Sq, output_dim)
    assert jnp.allclose(out_bf16, ref, atol=1e-1, rtol=1e-1), "bf16 mismatch"

    print("KERNEL_OK")
</pallas_src>

<mosaic_0001>
module attributes {stable_mosaic.version = 11 : i64} {
  func.func @_attention_kernel(%arg0: i32, %arg1: i32, %arg2: memref<2x8x16xf32, #tpu.memory_space<vmem>>, %arg3: memref<2x8x16xf32, #tpu.memory_space<vmem>>, %arg4: memref<2x8x16xf32, #tpu.memory_space<vmem>>, %arg5: memref<16x32xf32, #tpu.memory_space<vmem>>, %arg6: memref<1x32xf32, #tpu.memory_space<vmem>>, %arg7: memref<16x32xf32, #tpu.memory_space<vmem>>, %arg8: memref<1x32xf32, #tpu.memory_space<vmem>>, %arg9: memref<16x32xf32, #tpu.memory_space<vmem>>, %arg10: memref<1x32xf32, #tpu.memory_space<vmem>>, %arg11: memref<2x8x32xf32, #tpu.memory_space<vmem>>, %arg12: memref<2x8x32xf32, #tpu.memory_space<vmem>>, %arg13: memref<2x8x1xf32, #tpu.memory_space<vmem>>, %arg14: memref<2x8x1xf32, #tpu.memory_space<vmem>>, %arg15: memref<2x8x32xf32, #tpu.memory_space<vmem>>) attributes {dimension_semantics = [#tpu.dimension_semantics<parallel>, #tpu.dimension_semantics<arbitrary>], iteration_bounds = array<i64: 2, 2>, scalar_prefetch = 0 : i64, scratch_operands = 4 : i64, tpu.core_type = #tpu.core_type<tc>, window_params = [{transform_indices = @transform_0, window_bounds = array<i64: 2, 8, 16>}, {transform_indices = @transform_1, window_bounds = array<i64: 2, 8, 16>}, {transform_indices = @transform_2, window_bounds = array<i64: 2, 8, 16>}, {pipeline_mode = #tpu.pipeline_mode<synchronous>, transform_indices = @transform_3, window_bounds = array<i64: 16, 32>}, {pipeline_mode = #tpu.pipeline_mode<synchronous>, transform_indices = @transform_4, window_bounds = array<i64: 1, 32>}, {pipeline_mode = #tpu.pipeline_mode<synchronous>, transform_indices = @transform_5, window_bounds = array<i64: 16, 32>}, {pipeline_mode = #tpu.pipeline_mode<synchronous>, transform_indices = @transform_6, window_bounds = array<i64: 1, 32>}, {pipeline_mode = #tpu.pipeline_mode<synchronous>, transform_indices = @transform_7, window_bounds = array<i64: 16, 32>}, {pipeline_mode = #tpu.pipeline_mode<synchronous>, transform_indices = @transform_8, window_bounds = array<i64: 1, 32>}, {transform_indices = @transform_9, window_bounds = array<i64: 2, 8, 32>}]} {
    %c0_i32 = arith.constant 0 : i32
    %0 = arith.cmpi eq, %arg1, %c0_i32 : i32
    %1 = arith.extui %0 : i1 to i32
    %c0_i32_0 = arith.constant 0 : i32
    %2 = arith.cmpi ne, %1, %c0_i32_0 : i32
    scf.if %2 {
      %c0_41 = arith.constant 0 : index
      %c0_42 = arith.constant 0 : index
      %c0_43 = arith.constant 0 : index
      %46 = vector.load %arg2[%c0_41, %c0_42, %c0_43] : memref<2x8x16xf32, #tpu.memory_space<vmem>>, vector<2x8x16xf32>
      %47 = vector.shape_cast %46 : vector<2x8x16xf32> to vector<16x16xf32>
      %c0_44 = arith.constant 0 : index
      %c0_45 = arith.constant 0 : index
      %48 = vector.load %arg5[%c0_44, %c0_45] : memref<16x32xf32, #tpu.memory_space<vmem>>, vector<16x32xf32>
      %cst_46 = arith.constant dense<0.000000e+00> : vector<16x32xf32>
      %49 = tpu.matmul %47, %48, %cst_46 {dimension_numbers = #tpu.dot_dimension_numbers<[1], [0], [0], [1], [0, 0, 1, 1], [], []>} : vector<16x16xf32>, vector<16x32xf32>, vector<16x32xf32> -> vector<16x32xf32>
      %c0_47 = arith.constant 0 : index
      %c0_48 = arith.constant 0 : index
      %50 = vector.load %arg6[%c0_47, %c0_48] : memref<1x32xf32, #tpu.memory_space<vmem>>, vector<1x32xf32>
      %51 = vector.broadcast %50 : vector<1x32xf32> to vector<16x32xf32>
      %52 = arith.addf %49, %51 : vector<16x32xf32>
      %53 = vector.shape_cast %52 : vector<16x32xf32> to vector<2x8x32xf32>
      %c0_49 = arith.constant 0 : index
      %c0_50 = arith.constant 0 : index
      %c0_51 = arith.constant 0 : index
      %54 = vector.load %arg12[%c0_49, %c0_50, %c0_51] : memref<2x8x32xf32, #tpu.memory_space<vmem>>, vector<2x8x32xf32>
      tpu.vector_store %arg12[%c0_49, %c0_50, %c0_51], %53 {strides = array<i32>} : memref<2x8x32xf32, #tpu.memory_space<vmem>>, vector<2x8x32xf32>,
      %cst_52 = arith.constant 0xFF800000 : f32
      %55 = vector.broadcast %cst_52 : f32 to vector<2x8x1xf32>
      %c0_53 = arith.constant 0 : index
      %c0_54 = arith.constant 0 : index
      %c0_55 = arith.constant 0 : index
      %56 = vector.load %arg13[%c0_53, %c0_54, %c0_55] : memref<2x8x1xf32, #tpu.memory_space<vmem>>, vector<2x8x1xf32>
      tpu.vector_store %arg13[%c0_53, %c0_54, %c0_55], %55 {strides = array<i32>} : memref<2x8x1xf32, #tpu.memory_space<vmem>>, vector<2x8x1xf32>,
      %cst_56 = arith.constant 0.000000e+00 : f32
      %57 = vector.broadcast %cst_56 : f32 to vector<2x8x1xf32>
      %c0_57 = arith.constant 0 : index
      %c0_58 = arith.constant 0 : index
      %c0_59 = arith.constant 0 : index
      %58 = vector.load %arg14[%c0_57, %c0_58, %c0_59] : memref<2x8x1xf32, #tpu.memory_space<vmem>>, vector<2x8x1xf32>
      tpu.vector_store %arg14[%c0_57, %c0_58, %c0_59], %57 {strides = array<i32>} : memref<2x8x1xf32, #tpu.memory_space<vmem>>, vector<2x8x1xf32>,
      %cst_60 = arith.constant 0.000000e+00 : f32
      %59 = vector.broadcast %cst_60 : f32 to vector<2x8x32xf32>
      %c0_61 = arith.constant 0 : index
      %c0_62 = arith.constant 0 : index
      %c0_63 = arith.constant 0 : index
      %60 = vector.load %arg15[%c0_61, %c0_62, %c0_63] : memref<2x8x32xf32, #tpu.memory_space<vmem>>, vector<2x8x32xf32>
      tpu.vector_store %arg15[%c0_61, %c0_62, %c0_63], %59 {strides = array<i32>} : memref<2x8x32xf32, #tpu.memory_space<vmem>>, vector<2x8x32xf32>,
    } else {
    }
    %c0 = arith.constant 0 : index
    %c0_1 = arith.constant 0 : index
    %c0_2 = arith.constant 0 : index
    %3 = vector.load %arg3[%c0, %c0_1, %c0_2] : memref<2x8x16xf32, #tpu.memory_space<vmem>>, vector<2x8x16xf32>
    %4 = vector.shape_cast %3 : vector<2x8x16xf32> to vector<16x16xf32>
    %c0_3 = arith.constant 0 : index
    %c0_4 = arith.constant 0 : index
    %c0_5 = arith.constant 0 : index
    %5 = vector.load %arg4[%c0_3, %c0_4, %c0_5] : memref<2x8x16xf32, #tpu.memory_space<vmem>>, vector<2x8x16xf32>
    %6 = vector.shape_cast %5 : vector<2x8x16xf32> to vector<16x16xf32>
    %c0_6 = arith.constant 0 : index
    %c0_7 = arith.constant 0 : index
    %7 = vector.load %arg7[%c0_6, %c0_7] : memref<16x32xf32, #tpu.memory_space<vmem>>, vector<16x32xf32>
    %cst = arith.constant dense<0.000000e+00> : vector<16x32xf32>
    %8 = tpu.matmul %4, %7, %cst {dimension_numbers = #tpu.dot_dimension_numbers<[1], [0], [0], [1], [0, 0, 1, 1], [], []>} : vector<16x16xf32>, vector<16x32xf32>, vector<16x32xf32> -> vector<16x32xf32>
    %c0_8 = arith.constant 0 : index
    %c0_9 = arith.constant 0 : index
    %9 = vector.load %arg8[%c0_8, %c0_9] : memref<1x32xf32, #tpu.memory_space<vmem>>, vector<1x32xf32>
    %10 = vector.broadcast %9 : vector<1x32xf32> to vector<16x32xf32>
    %11 = arith.addf %8, %10 : vector<16x32xf32>
    %c0_10 = arith.constant 0 : index
    %c0_11 = arith.constant 0 : index
    %12 = vector.load %arg9[%c0_10, %c0_11] : memref<16x32xf32, #tpu.memory_space<vmem>>, vector<16x32xf32>
    %cst_12 = arith.constant dense<0.000000e+00> : vector<16x32xf32>
    %13 = tpu.matmul %6, %12, %cst_12 {dimension_numbers = #tpu.dot_dimension_numbers<[1], [0], [0], [1], [0, 0, 1, 1], [], []>} : vector<16x16xf32>, vector<16x32xf32>, vector<16x32xf32> -> vector<16x32xf32>
    %c0_13 = arith.constant 0 : index
    %c0_14 = arith.constant 0 : index
    %14 = vector.load %arg10[%c0_13, %c0_14] : memref<1x32xf32, #tpu.memory_space<vmem>>, vector<1x32xf32>
    %15 = vector.broadcast %14 : vector<1x32xf32> to vector<16x32xf32>
    %16 = arith.addf %13, %15 : vector<16x32xf32>
    %17 = vector.shape_cast %11 : vector<16x32xf32> to vector<2x8x32xf32>
    %18 = vector.shape_cast %16 : vector<16x32xf32> to vector<2x8x32xf32>
    %c0_15 = arith.constant 0 : index
    %c0_16 = arith.constant 0 : index
    %c0_17 = arith.constant 0 : index
    %19 = vector.load %arg12[%c0_15, %c0_16, %c0_17] : memref<2x8x32xf32, #tpu.memory_space<vmem>>, vector<2x8x32xf32>
    %cst_18 = arith.constant dense<0.000000e+00> : vector<2x8x8xf32>
    %20 = tpu.matmul %19, %17, %cst_18 {dimension_numbers = #tpu.dot_dimension_numbers<[2], [2], [1], [1], [0, 0, 0, 1, 1, 1], [0], [0]>} : vector<2x8x32xf32>, vector<2x8x32xf32>, vector<2x8x8xf32> -> vector<2x8x8xf32>
    %c0_19 = arith.constant 0 : index
    %c0_20 = arith.constant 0 : index
    %c0_21 = arith.constant 0 : index
    %21 = vector.load %arg13[%c0_19, %c0_20, %c0_21] : memref<2x8x1xf32, #tpu.memory_space<vmem>>, vector<2x8x1xf32>
    %cst_22 = arith.constant dense<0xFF800000> : vector<2x8xf32>
    %22 = vector.multi_reduction <maximumf>, %20, %cst_22 [2] : vector<2x8x8xf32> to vector<2x8xf32>
    %23 = vector.shape_cast %22 : vector<2x8xf32> to vector<2x8x1xf32>
    %24 = arith.maximumf %21, %23 : vector<2x8x1xf32>
    %25 = arith.subf %21, %24 : vector<2x8x1xf32>
    %26 = math.exp %25 : vector<2x8x1xf32>
    %27 = vector.broadcast %24 : vector<2x8x1xf32> to vector<2x8x8xf32>
    %28 = arith.subf %20, %27 : vector<2x8x8xf32>
    %29 = math.exp %28 : vector<2x8x8xf32>
    %c0_23 = arith.constant 0 : index
    %c0_24 = arith.constant 0 : index
    %c0_25 = arith.constant 0 : index
    %30 = vector.load %arg14[%c0_23, %c0_24, %c0_25] : memref<2x8x1xf32, #tpu.memory_space<vmem>>, vector<2x8x1xf32>
    %31 = arith.mulf %26, %30 : vector<2x8x1xf32>
    %cst_26 = arith.constant dense<0.000000e+00> : vector<2x8xf32>
    %32 = vector.multi_reduction <add>, %29, %cst_26 [2] : vector<2x8x8xf32> to vector<2x8xf32>
    %33 = vector.shape_cast %32 : vector<2x8xf32> to vector<2x8x1xf32>
    %34 = arith.addf %31, %33 : vector<2x8x1xf32>
    %c0_27 = arith.constant 0 : index
    %c0_28 = arith.constant 0 : index
    %c0_29 = arith.constant 0 : index
    %35 = vector.load %arg14[%c0_27, %c0_28, %c0_29] : memref<2x8x1xf32, #tpu.memory_space<vmem>>, vector<2x8x1xf32>
    tpu.vector_store %arg14[%c0_27, %c0_28, %c0_29], %34 {strides = array<i32>} : memref<2x8x1xf32, #tpu.memory_space<vmem>>, vector<2x8x1xf32>,
    %c0_30 = arith.constant 0 : index
    %c0_31 = arith.constant 0 : index
    %c0_32 = arith.constant 0 : index
    %36 = vector.load %arg15[%c0_30, %c0_31, %c0_32] : memref<2x8x32xf32, #tpu.memory_space<vmem>>, vector<2x8x32xf32>
    %37 = vector.broadcast %26 : vector<2x8x1xf32> to vector<2x8x32xf32>
    %38 = arith.mulf %37, %36 : vector<2x8x32xf32>
    %cst_33 = arith.constant dense<0.000000e+00> : vector<2x8x32xf32>
    %39 = tpu.matmul %29, %18, %cst_33 {dimension_numbers = #tpu.dot_dimension_numbers<[2], [1], [1], [2], [0, 0, 0, 1, 1, 2], [0], [0]>} : vector<2x8x8xf32>, vector<2x8x32xf32>, vector<2x8x32xf32> -> vector<2x8x32xf32>
    %40 = arith.addf %38, %39 : vector<2x8x32xf32>
    %c0_34 = arith.constant 0 : index
    %c0_35 = arith.constant 0 : index
    %c0_36 = arith.constant 0 : index
    %41 = vector.load %arg15[%c0_34, %c0_35, %c0_36] : memref<2x8x32xf32, #tpu.memory_space<vmem>>, vector<2x8x32xf32>
    tpu.vector_store %arg15[%c0_34, %c0_35, %c0_36], %40 {strides = array<i32>} : memref<2x8x32xf32, #tpu.memory_space<vmem>>, vector<2x8x32xf32>,
    %c0_37 = arith.constant 0 : index
    %c0_38 = arith.constant 0 : index
    %c0_39 = arith.constant 0 : index
    %42 = vector.load %arg13[%c0_37, %c0_38, %c0_39] : memref<2x8x1xf32, #tpu.memory_space<vmem>>, vector<2x8x1xf32>
    tpu.vector_store %arg13[%c0_37, %c0_38, %c0_39], %24 {strides = array<i32>} : memref<2x8x1xf32, #tpu.memory_space<vmem>>, vector<2x8x1xf32>,
    %c1_i32 = arith.constant 1 : i32
    %43 = arith.cmpi eq, %arg1, %c1_i32 : i32
    %44 = arith.extui %43 : i1 to i32
    %c0_i32_40 = arith.constant 0 : i32
    %45 = arith.cmpi ne, %44, %c0_i32_40 : i32
    scf.if %45 {
      %c0_41 = arith.constant 0 : index
      %c0_42 = arith.constant 0 : index
      %c0_43 = arith.constant 0 : index
      %46 = vector.load %arg14[%c0_41, %c0_42, %c0_43] : memref<2x8x1xf32, #tpu.memory_space<vmem>>, vector<2x8x1xf32>
      %47 = tpu.reciprocal %46 {approx = true} : vector<2x8x1xf32> -> vector<2x8x1xf32>
      %c0_44 = arith.constant 0 : index
      %c0_45 = arith.constant 0 : index
      %c0_46 = arith.constant 0 : index
      %48 = vector.load %arg15[%c0_44, %c0_45, %c0_46] : memref<2x8x32xf32, #tpu.memory_space<vmem>>, vector<2x8x32xf32>
      %49 = vector.broadcast %47 : vector<2x8x1xf32> to vector<2x8x32xf32>
      %50 = arith.mulf %48, %49 : vector<2x8x32xf32>
      %c0_47 = arith.constant 0 : index
      %c0_48 = arith.constant 0 : index
      %c0_49 = arith.constant 0 : index
      %51 = vector.load %arg11[%c0_47, %c0_48, %c0_49] : memref<2x8x32xf32, #tpu.memory_space<vmem>>, vector<2x8x32xf32>
      tpu.vector_store %arg11[%c0_47, %c0_48, %c0_49], %50 {strides = array<i32>} : memref<2x8x32xf32, #tpu.memory_space<vmem>>, vector<2x8x32xf32>,
    } else {
    }
    return
  }
  func.func @transform_0(%arg0: i32, %arg1: i32) -> (i32, i32, i32) {
    %c0_i32 = arith.constant 0 : i32
    %c0_i32_0 = arith.constant 0 : i32
    %c0_i32_1 = arith.constant 0 : i32
    return %arg0, %c0_i32, %c0_i32_0 : i32, i32, i32
  }
  func.func @transform_1(%arg0: i32, %arg1: i32) -> (i32, i32, i32) {
    %c0_i32 = arith.constant 0 : i32
    %c0_i32_0 = arith.constant 0 : i32
    return %arg0, %arg1, %c0_i32 : i32, i32, i32
  }
  func.func @transform_2(%arg0: i32, %arg1: i32) -> (i32, i32, i32) {
    %c0_i32 = arith.constant 0 : i32
    %c0_i32_0 = arith.constant 0 : i32
    return %arg0, %arg1, %c0_i32 : i32, i32, i32
  }
  func.func @transform_3(%arg0: i32, %arg1: i32) -> (i32, i32) {
    %c0_i32 = arith.constant 0 : i32
    %c0_i32_0 = arith.constant 0 : i32
    %c0_i32_1 = arith.constant 0 : i32
    return %c0_i32, %c0_i32_0 : i32, i32
  }
  func.func @transform_4(%arg0: i32, %arg1: i32) -> (i32, i32) {
    %c0_i32 = arith.constant 0 : i32
    %c0_i32_0 = arith.constant 0 : i32
    %c0_i32_1 = arith.constant 0 : i32
    return %c0_i32, %c0_i32_0 : i32, i32
  }
  func.func @transform_5(%arg0: i32, %arg1: i32) -> (i32, i32) {
    %c0_i32 = arith.constant 0 : i32
    %c0_i32_0 = arith.constant 0 : i32
    %c0_i32_1 = arith.constant 0 : i32
    return %c0_i32, %c0_i32_0 : i32, i32
  }
  func.func @transform_6(%arg0: i32, %arg1: i32) -> (i32, i32) {
    %c0_i32 = arith.constant 0 : i32
    %c0_i32_0 = arith.constant 0 : i32
    %c0_i32_1 = arith.constant 0 : i32
    return %c0_i32, %c0_i32_0 : i32, i32
  }
  func.func @transform_7(%arg0: i32, %arg1: i32) -> (i32, i32) {
    %c0_i32 = arith.constant 0 : i32
    %c0_i32_0 = arith.constant 0 : i32
    %c0_i32_1 = arith.constant 0 : i32
    return %c0_i32, %c0_i32_0 : i32, i32
  }
  func.func @transform_8(%arg0: i32, %arg1: i32) -> (i32, i32) {
    %c0_i32 = arith.constant 0 : i32
    %c0_i32_0 = arith.constant 0 : i32
    %c0_i32_1 = arith.constant 0 : i32
    return %c0_i32, %c0_i32_0 : i32, i32
  }
  func.func @transform_9(%arg0: i32, %arg1: i32) -> (i32, i32, i32) {
    %c0_i32 = arith.constant 0 : i32
    %c0_i32_0 = arith.constant 0 : i32
    %c0_i32_1 = arith.constant 0 : i32
    return %arg0, %c0_i32, %c0_i32_0 : i32, i32, i32
  }
}

</mosaic_0001>

<llo_original>
// kernel: tpu_custom_call.1
$region0: #{tpu_custom_call.1}
  #allocation0 [shape = 'u32[]', space=smem, size = 0x4, offset = 0x4, fixed_abs, tag = 'smem constant byte address 0x4 - core index']
  #allocation1 [shape = 'u32[72,128]{1,0:T(1,128)}', space=vmem, size = 0x9000, scoped, tag = 'internal scratch']
  #allocation2 [shape = 'f32[2,8,32]{2,1,0:T(8,128)}', space=vmem, size = 0x2000, scoped, tag = 'scratch operand']
  #allocation3 [shape = 'f32[2,8,1]{2,1,0:T(8,128)}', space=vmem, size = 0x2000, scoped, tag = 'scratch operand']
  #allocation4 [shape = 'f32[2,8,1]{2,1,0:T(8,128)}', space=vmem, size = 0x2000, scoped, tag = 'scratch operand']
  #allocation5 [shape = 'f32[2,8,32]{2,1,0:T(8,128)}', space=vmem, size = 0x2000, scoped, tag = 'scratch operand']
  %s0 = inlined_call_operand.hbm [shape: f32[4,8,16], index: 0, kind: input, shape index: {}]
  %s1 = inlined_call_operand.hbm [shape: f32[4,16,16], index: 1, kind: input, shape index: {}]
  %s2 = inlined_call_operand.hbm [shape: f32[4,16,16], index: 2, kind: input, shape index: {}]
  %s3 = inlined_call_operand.hbm [shape: f32[16,32], index: 3, kind: input, shape index: {}]
  %s4 = inlined_call_operand.vmem [shape: f32[1,32], index: 4, kind: input, shape index: {}]
  %s5 = inlined_call_operand.hbm [shape: f32[16,32], index: 5, kind: input, shape index: {}]
  %s6 = inlined_call_operand.vmem [shape: f32[1,32], index: 6, kind: input, shape index: {}]
  %s7 = inlined_call_operand.hbm [shape: f32[16,32], index: 7, kind: input, shape index: {}]
  %s8 = inlined_call_operand.vmem [shape: f32[1,32], index: 8, kind: input, shape index: {}]
  %s9 = inlined_call_operand.hbm [shape: f32[4,8,32], index: 9, kind: output, shape index: {}]
  %s10 = sld [smem:[#allocation0]]
  $region101: #{tpu_custom_call.1} parent=0
    _
  %s12 = ssub.s32 1, %s10
  %s13 = scalar_select 0, %s12, %s10
  $region1: #{tpu_custom_call.1} parent=0
    #allocation6 [shape = 'u8[16384]{0}', space=vmem, size = 0x4000, scoped, tag = 'input window, operand 0']
    #allocation7 [shape = 's32[2]{0}', space=sflag, size = 0x8, scoped, tag = 'scoped memory for tpu_custom_call.1']
    #allocation8 [shape = 's32[2]{0}', space=sflag, size = 0x8, scoped, tag = 'scoped memory for tpu_custom_call.1']
    #allocation9 [shape = 'u8[16384]{0}', space=vmem, size = 0x4000, scoped, tag = 'input window, operand 1']
    #allocation10 [shape = 's32[2]{0}', space=sflag, size = 0x8, scoped, tag = 'scoped memory for tpu_custom_call.1']
    #allocation11 [shape = 'u8[16384]{0}', space=vmem, size = 0x4000, scoped, tag = 'input window, operand 2']
    #allocation12 [shape = 'u8[8192]{0}', space=vmem, size = 0x2000, scoped, tag = 'input window, operand 3, single buffered']
    #allocation13 [shape = 's32[1]{0}', space=sflag, size = 0x4, scoped, tag = 'scoped memory for tpu_custom_call.1']
    #allocation14 [shape = 'u8[8192]{0}', space=vmem, size = 0x2000, scoped, tag = 'input window, operand 5, single buffered']
    #allocation15 [shape = 'u8[8192]{0}', space=vmem, size = 0x2000, scoped, tag = 'input window, operand 7, single buffered']
    #allocation16 [shape = 's32[1]{0}', space=sflag, size = 0x4, scoped, tag = 'scoped memory for tpu_custom_call.1']
    #allocation17 [shape = 'u8[16384]{0}', space=vmem, size = 0x4000, scoped, tag = 'output window, operand 0']
    %14 = vsyncpa [#allocation7], 0
    %s15 = scalar_lea.sflag [#allocation7], 1
    %16 = vsyncpa %s15, 0
    %17 = vsyncpa [#allocation10], 0
    %s18 = scalar_lea.sflag [#allocation10], 1
    %19 = vsyncpa %s18, 0
    %20 = vsyncpa [#allocation13], 0
    %21 = vsyncpa [#allocation16], 0
    %22 = vsyncpa [#allocation8], 0
    %s23 = scalar_lea.sflag [#allocation8], 1
    %24 = vsyncpa %s23, 0
    loop: start=0, step=1, limit=6
    $region2: #{tpu_custom_call.1} parent=1 // loop_pre_header
      _
    $region3: #{tpu_custom_call.1} parent=1 // loop_header
      %s26 = sphi 0, %s30
      %p27 = scmp.ge.s32.totalorder %s26, 6
      %s33 = sphi 0, %s45
      %s34 = sphi 0, %s41
      %s35 = sphi 0, %s33
      %s36 = sphi 0, %s34
      %s37 = sphi 0, %s35
      %s38 = sphi 0, %s36
      %s48 = sphi 0, %s50
      %s51 = sphi 0, %s48
      %s52 = sphi 0, %s51
      %s68 = sphi 0, %s52
      %s76 = sphi 0, %s78
      %s79 = sphi 0, %s76
      %s80 = sphi 0, %s79
      %s96 = sphi 0, %s80
      %s104 = sphi 0, %s106
      %s107 = sphi 0, %s104
      %s108 = sphi 0, %s107
      %s124 = sphi 0, %s108
      %s128 = sphi 0, %s128
      %s130 = sphi 0, %s128
      %s131 = sphi 0, %s130
      %s145 = sphi 0, %s131
      %s149 = sphi 0, %s149
      %s151 = sphi 0, %s149
      %s152 = sphi 0, %s151
      %s166 = sphi 0, %s152
      %s170 = sphi 0, %s170
      %s172 = sphi 0, %s170
      %s173 = sphi 0, %s172
      %s187 = sphi 0, %s173
      %s191 = sphi 0, %s191
      %s193 = sphi 0, %s191
      %s194 = sphi 0, %s193
      %s208 = sphi 0, %s194
      %s212 = sphi 0, %s212
      %s214 = sphi 0, %s212
      %s215 = sphi 0, %s214
      %s229 = sphi 0, %s215
      %s233 = sphi 0, %s233
      %s235 = sphi 0, %s233
      %s236 = sphi 0, %s235
      %s250 = sphi 0, %s236
      %s256 = sphi 0, %s258
      %s259 = sphi 0, %s256
      %s260 = sphi 0, %s259
      %s276 = sphi 0, %s260
    $region4: #{tpu_custom_call.1} parent=1 // loop_header_branch
      %29 = sbr.rel (%p27) target = $region8
    $region5: #{tpu_custom_call.1} parent=1 // loop_body
      %s31 = ssub.s32 %s26, 1
      %s32 = ssub.s32 %s26, 2
      %s39 = sadd.s32 1, %s34
      %p40 = scmp.ge.s32.totalorder %s39, 2
      %s41 = scalar_select %p40, 0, %s39
      %s42 = sadd.s32 1, %s33
      %s43 = scalar_select %p40, %s42, %s33
      %p44 = scmp.ge.s32.totalorder %s43, 2
      %s45 = scalar_select %p44, 0, %s43
      %s46 = ssub.s32 %s33, %s45
      %p47 = scmp.eq.s32.totalorder %s46, 0
      %s49 = sadd.s32 %s48, 1
      %s50 = scalar_select %p47, %s48, %s49
      %p53 = pneg %p47
      %p54 = scmp.eq.s32.totalorder %s26, 3
      %p55 = por %p53, %p54
      %p56 = scmp.ne.s32.totalorder %s48, %s51
      %p57 = scmp.eq.s32.totalorder %s26, 0
      %p58 = por %p56, %p57
      %p59 = scmp.ne.s32.totalorder %s48, %s51
      %p60 = scmp.eq.s32.totalorder %s31, 3
      %p61 = por %p59, %p60
      %p62 = scmp.ne.s32.totalorder %s51, %s52
      %p63 = scmp.eq.s32.totalorder %s31, 0
      %p64 = por %p62, %p63
      %p65 = scmp.ne.s32.totalorder %s51, %s52
      %p66 = scmp.eq.s32.totalorder %s32, 3
      %p67 = por %p65, %p66
      %p69 = scmp.ne.s32.totalorder %s52, %s68
      %p70 = scmp.eq.s32.totalorder %s32, 0
      %p71 = por %p69, %p70
      %s72 = ssub.s32 %s33, %s45
      %s73 = ssub.s32 %s34, %s41
      %s74 = sor.u32 %s72, %s73
      %p75 = scmp.eq.s32.totalorder %s74, 0
      %s77 = sadd.s32 %s76, 1
      %s78 = scalar_select %p75, %s76, %s77
      %p81 = pneg %p75
      %p82 = scmp.eq.s32.totalorder %s26, 3
      %p83 = por %p81, %p82
      %p84 = scmp.ne.s32.totalorder %s76, %s79
      %p85 = scmp.eq.s32.totalorder %s26, 0
      %p86 = por %p84, %p85
      %p87 = scmp.ne.s32.totalorder %s76, %s79
      %p88 = scmp.eq.s32.totalorder %s31, 3
      %p89 = por %p87, %p88
      %p90 = scmp.ne.s32.totalorder %s79, %s80
      %p91 = scmp.eq.s32.totalorder %s31, 0
      %p92 = por %p90, %p91
      %p93 = scmp.ne.s32.totalorder %s79, %s80
      %p94 = scmp.eq.s32.totalorder %s32, 3
      %p95 = por %p93, %p94
      %p97 = scmp.ne.s32.totalorder %s80, %s96
      %p98 = scmp.eq.s32.totalorder %s32, 0
      %p99 = por %p97, %p98
      %s100 = ssub.s32 %s33, %s45
      %s101 = ssub.s32 %s34, %s41
      %s102 = sor.u32 %s100, %s101
      %p103 = scmp.eq.s32.totalorder %s102, 0
      %s105 = sadd.s32 %s104, 1
      %s106 = scalar_select %p103, %s104, %s105
      %p109 = pneg %p103
      %p110 = scmp.eq.s32.totalorder %s26, 3
      %p111 = por %p109, %p110
      %p112 = scmp.ne.s32.totalorder %s104, %s107
      %p113 = scmp.eq.s32.totalorder %s26, 0
      %p114 = por %p112, %p113
      %p115 = scmp.ne.s32.totalorder %s104, %s107
      %p116 = scmp.eq.s32.totalorder %s31, 3
      %p117 = por %p115, %p116
      %p118 = scmp.ne.s32.totalorder %s107, %s108
      %p119 = scmp.eq.s32.totalorder %s31, 0
      %p120 = por %p118, %p119
      %p121 = scmp.ne.s32.totalorder %s107, %s108
      %p122 = scmp.eq.s32.totalorder %s32, 3
      %p123 = por %p121, %p122
      %p125 = scmp.ne.s32.totalorder %s108, %s124
      %p126 = scmp.eq.s32.totalorder %s32, 0
      %p127 = por %p125, %p126
      %s129 = sadd.s32 %s128, 1
      %p132 = scmp.eq.s32.totalorder %s26, 3
      %p133 = scmp.ne.s32.totalorder %s128, %s130
      %p134 = scmp.eq.s32.totalorder %s26, 0
      %p135 = por %p133, %p134
      %p136 = scmp.ne.s32.totalorder %s128, %s130
      %p137 = scmp.eq.s32.totalorder %s31, 3
      %p138 = por %p136, %p137
      %p139 = scmp.ne.s32.totalorder %s130, %s131
      %p140 = scmp.eq.s32.totalorder %s31, 0
      %p141 = por %p139, %p140
      %p142 = scmp.ne.s32.totalorder %s130, %s131
      %p143 = scmp.eq.s32.totalorder %s32, 3
      %p144 = por %p142, %p143
      %p146 = scmp.ne.s32.totalorder %s131, %s145
      %p147 = scmp.eq.s32.totalorder %s32, 0
      %p148 = por %p146, %p147
      %s150 = sadd.s32 %s149, 1
      %p153 = scmp.eq.s32.totalorder %s26, 3
      %p154 = scmp.ne.s32.totalorder %s149, %s151
      %p155 = scmp.eq.s32.totalorder %s26, 0
      %p156 = por %p154, %p155
      %p157 = scmp.ne.s32.totalorder %s149, %s151
      %p158 = scmp.eq.s32.totalorder %s31, 3
      %p159 = por %p157, %p158
      %p160 = scmp.ne.s32.totalorder %s151, %s152
      %p161 = scmp.eq.s32.totalorder %s31, 0
      %p162 = por %p160, %p161
      %p163 = scmp.ne.s32.totalorder %s151, %s152
      %p164 = scmp.eq.s32.totalorder %s32, 3
      %p165 = por %p163, %p164
      %p167 = scmp.ne.s32.totalorder %s152, %s166
      %p168 = scmp.eq.s32.totalorder %s32, 0
      %p169 = por %p167, %p168
      %s171 = sadd.s32 %s170, 1
      %p174 = scmp.eq.s32.totalorder %s26, 3
      %p175 = scmp.ne.s32.totalorder %s170, %s172
      %p176 = scmp.eq.s32.totalorder %s26, 0
      %p177 = por %p175, %p176
      %p178 = scmp.ne.s32.totalorder %s170, %s172
      %p179 = scmp.eq.s32.totalorder %s31, 3
      %p180 = por %p178, %p179
      %p181 = scmp.ne.s32.totalorder %s172, %s173
      %p182 = scmp.eq.s32.totalorder %s31, 0
      %p183 = por %p181, %p182
      %p184 = scmp.ne.s32.totalorder %s172, %s173
      %p185 = scmp.eq.s32.totalorder %s32, 3
      %p186 = por %p184, %p185
      %p188 = scmp.ne.s32.totalorder %s173, %s187
      %p189 = scmp.eq.s32.totalorder %s32, 0
      %p190 = por %p188, %p189
      %s192 = sadd.s32 %s191, 1
      %p195 = scmp.eq.s32.totalorder %s26, 3
      %p196 = scmp.ne.s32.totalorder %s191, %s193
      %p197 = scmp.eq.s32.totalorder %s26, 0
      %p198 = por %p196, %p197
      %p199 = scmp.ne.s32.totalorder %s191, %s193
      %p200 = scmp.eq.s32.totalorder %s31, 3
      %p201 = por %p199, %p200
      %p202 = scmp.ne.s32.totalorder %s193, %s194
      %p203 = scmp.eq.s32.totalorder %s31, 0
      %p204 = por %p202, %p203
      %p205 = scmp.ne.s32.totalorder %s193, %s194
      %p206 = scmp.eq.s32.totalorder %s32, 3
      %p207 = por %p205, %p206
      %p209 = scmp.ne.s32.totalorder %s194, %s208
      %p210 = scmp.eq.s32.totalorder %s32, 0
      %p211 = por %p209, %p210
      %s213 = sadd.s32 %s212, 1
      %p216 = scmp.eq.s32.totalorder %s26, 3
      %p217 = scmp.ne.s32.totalorder %s212, %s214
      %p218 = scmp.eq.s32.totalorder %s26, 0
      %p219 = por %p217, %p218
      %p220 = scmp.ne.s32.totalorder %s212, %s214
      %p221 = scmp.eq.s32.totalorder %s31, 3
      %p222 = por %p220, %p221
      %p223 = scmp.ne.s32.totalorder %s214, %s215
      %p224 = scmp.eq.s32.totalorder %s31, 0
      %p225 = por %p223, %p224
      %p226 = scmp.ne.s32.totalorder %s214, %s215
      %p227 = scmp.eq.s32.totalorder %s32, 3
      %p228 = por %p226, %p227
      %p230 = scmp.ne.s32.totalorder %s215, %s229
      %p231 = scmp.eq.s32.totalorder %s32, 0
      %p232 = por %p230, %p231
      %s234 = sadd.s32 %s233, 1
      %p237 = scmp.eq.s32.totalorder %s26, 3
      %p238 = scmp.ne.s32.totalorder %s233, %s235
      %p239 = scmp.eq.s32.totalorder %s26, 0
      %p240 = por %p238, %p239
      %p241 = scmp.ne.s32.totalorder %s233, %s235
      %p242 = scmp.eq.s32.totalorder %s31, 3
      %p243 = por %p241, %p242
      %p244 = scmp.ne.s32.totalorder %s235, %s236
      %p245 = scmp.eq.s32.totalorder %s31, 0
      %p246 = por %p244, %p245
      %p247 = scmp.ne.s32.totalorder %s235, %s236
      %p248 = scmp.eq.s32.totalorder %s32, 3
      %p249 = por %p247, %p248
      %p251 = scmp.ne.s32.totalorder %s236, %s250
      %p252 = scmp.eq.s32.totalorder %s32, 0
      %p253 = por %p251, %p252
      %s254 = ssub.s32 %s33, %s45
      %p255 = scmp.eq.s32.totalorder %s254, 0
      %s257 = sadd.s32 %s256, 1
      %s258 = scalar_select %p255, %s256, %s257
      %p261 = pneg %p255
      %p262 = scmp.eq.s32.totalorder %s26, 3
      %p263 = por %p261, %p262
      %p264 = scmp.ne.s32.totalorder %s256, %s259
      %p265 = scmp.eq.s32.totalorder %s26, 0
      %p266 = por %p264, %p265
      %p267 = scmp.ne.s32.totalorder %s256, %s259
      %p268 = scmp.eq.s32.totalorder %s31, 3
      %p269 = por %p267, %p268
      %p270 = scmp.ne.s32.totalorder %s259, %s260
      %p271 = scmp.eq.s32.totalorder %s31, 0
      %p272 = por %p270, %p271
      %p273 = scmp.ne.s32.totalorder %s259, %s260
      %p274 = scmp.eq.s32.totalorder %s32, 3
      %p275 = por %p273, %p274
      %p277 = scmp.ne.s32.totalorder %s260, %s276
      %p278 = scmp.eq.s32.totalorder %s32, 0
      %p279 = por %p277, %p278
      %p280 = scmp.le.s32.totalorder 1, %s26
      %p281 = scmp.lt.s32.totalorder %s26, 5
      %p282 = pnand %p280, %p281
      %p283 = pneg %p282
      // Predicated region
      $region9: #{tpu_custom_call.1} parent=5 // pred_check
        _
      $region10: #{tpu_custom_call.1} parent=5 // pred_check_branch
        %285 = sbr.rel (%p282) target = $region12
      $region11: #{tpu_custom_call.1} parent=5 // pred_region
        %s286 = ssub.s32 %s26, 1
        // Predicated region
        $region13: #{tpu_custom_call.1} parent=11 // pred_check
          %p287 = pneg %p141
        $region14: #{tpu_custom_call.1} parent=11 // pred_check_branch
          %289 = sbr.rel (%p287) target = $region16
        $region15: #{tpu_custom_call.1} parent=11 // pred_region
          %291 = vsyncadd [#allocation13], 0
          %s292 = sshll.u32 %s3, 4
          %s293 = int_to_ptr.hbm [resolvable:$true] %s292
          %s294 = sshll.u32 [#allocation12], 4
          %s295 = int_to_ptr.vmem [resolvable:$true] %s294
          %300 = dma.hbm_to_vmem [thread:$0]  %s293, 256, %s295, [#allocation13], 128, 128, 8
        $region16: #{tpu_custom_call.1} parent=11 // pred_fallthru
          _
        // Predicated region
        $region17: #{tpu_custom_call.1} parent=11 // pred_check
          %p301 = pneg %p162
        $region18: #{tpu_custom_call.1} parent=11 // pred_check_branch
          %303 = sbr.rel (%p301) target = $region20
        $region19: #{tpu_custom_call.1} parent=11 // pred_region
          _
        $region20: #{tpu_custom_call.1} parent=11 // pred_fallthru
          _
        // Predicated region
        $region21: #{tpu_custom_call.1} parent=11 // pred_check
          %p304 = pneg %p183
        $region22: #{tpu_custom_call.1} parent=11 // pred_check_branch
          %306 = sbr.rel (%p304) target = $region24
        $region23: #{tpu_custom_call.1} parent=11 // pred_region
          %308 = vsyncadd [#allocation13], 0
          %s309 = sshll.u32 %s5, 4
          %s310 = int_to_ptr.hbm [resolvable:$true] %s309
          %s311 = sshll.u32 [#allocation14], 4
          %s312 = int_to_ptr.vmem [resolvable:$true] %s311
          %317 = dma.hbm_to_vmem [thread:$0]  %s310, 256, %s312, [#allocation13], 128, 128, 8
        $region24: #{tpu_custom_call.1} parent=11 // pred_fallthru
          _
        // Predicated region
        $region25: #{tpu_custom_call.1} parent=11 // pred_check
          %p318 = pneg %p204
        $region26: #{tpu_custom_call.1} parent=11 // pred_check_branch
          %320 = sbr.rel (%p318) target = $region28
        $region27: #{tpu_custom_call.1} parent=11 // pred_region
          _
        $region28: #{tpu_custom_call.1} parent=11 // pred_fallthru
          _
        // Predicated region
        $region29: #{tpu_custom_call.1} parent=11 // pred_check
          %p321 = pneg %p225
        $region30: #{tpu_custom_call.1} parent=11 // pred_check_branch
          %323 = sbr.rel (%p321) target = $region32
        $region31: #{tpu_custom_call.1} parent=11 // pred_region
          %325 = vsyncadd [#allocation16], 0
          %s326 = sshll.u32 %s7, 4
          %s327 = int_to_ptr.hbm [resolvable:$true] %s326
          %s328 = sshll.u32 [#allocation15], 4
          %s329 = int_to_ptr.vmem [resolvable:$true] %s328
          %334 = dma.hbm_to_vmem [thread:$0]  %s327, 256, %s329, [#allocation16], 128, 128, 8
        $region32: #{tpu_custom_call.1} parent=11 // pred_fallthru
          _
        // Predicated region
        $region33: #{tpu_custom_call.1} parent=11 // pred_check
          %p335 = pneg %p246
        $region34: #{tpu_custom_call.1} parent=11 // pred_check_branch
          %337 = sbr.rel (%p335) target = $region36
        $region35: #{tpu_custom_call.1} parent=11 // pred_region
          _
        $region36: #{tpu_custom_call.1} parent=11 // pred_fallthru
          _
      $region12: #{tpu_custom_call.1} parent=5 // pred_fallthru
        _
      %p338 = scmp.lt.s32.totalorder %s26, 4
      // Predicated region
      $region37: #{tpu_custom_call.1} parent=5 // pred_check
        %p339 = pneg %p338
      $region38: #{tpu_custom_call.1} parent=5 // pred_check_branch
        %341 = sbr.rel (%p339) target = $region40
      $region39: #{tpu_custom_call.1} parent=5 // pred_region
        // Predicated region
        $region41: #{tpu_custom_call.1} parent=39 // pred_check
          %p342 = pneg %p58
        $region42: #{tpu_custom_call.1} parent=39 // pred_check_branch
          %344 = sbr.rel (%p342) target = $region44
        $region43: #{tpu_custom_call.1} parent=39 // pred_region
          %s345 = sand.u32 %s48, 1
          %s346 = scalar_lea.sflag [#allocation7], %s345
          %s347 = sand.u32 %s48, 1
          %s348 = smul.addr %s347, 16
          %s349 = scalar_lea.vmem [#allocation6], %s348
          %s350 = smul.u32 2, %s33
          %352 = vsyncadd %s346, 0
          %s353 = smul.addr %s350, 8
          %s354 = scalar_lea.hbm %s0, %s353
          %s355 = sshll.u32 %s354, 4
          %s356 = int_to_ptr.hbm [resolvable:$true] %s355
          %s357 = sshll.u32 %s349, 4
          %s358 = int_to_ptr.vmem [resolvable:$true] %s357
          %363 = dma.hbm_to_vmem [thread:$0]  %s356, 256, %s358, %s346, 128, 128, 8
        $region44: #{tpu_custom_call.1} parent=39 // pred_fallthru
          _
        // Predicated region
        $region45: #{tpu_custom_call.1} parent=39 // pred_check
          %p364 = pneg %p86
        $region46: #{tpu_custom_call.1} parent=39 // pred_check_branch
          %366 = sbr.rel (%p364) target = $region48
        $region47: #{tpu_custom_call.1} parent=39 // pred_region
          %s367 = sand.u32 %s26, 1
          %s368 = scalar_lea.sflag [#allocation10], %s367
          %s369 = sand.u32 %s76, 1
          %s370 = smul.addr %s369, 16
          %s371 = scalar_lea.vmem [#allocation9], %s370
          %s372 = smul.u32 2, %s33
          %374 = vsyncadd %s368, 0
          %s375 = smul.addr %s372, 2
          %s376 = sadd.s32 %s34, %s375
          %s377 = smul.addr %s376, 8
          %s378 = scalar_lea.hbm %s1, %s377
          %s379 = sshll.u32 %s378, 4
          %s380 = int_to_ptr.hbm [resolvable:$true] %s379
          %s381 = sshll.u32 %s371, 4
          %s382 = int_to_ptr.vmem [resolvable:$true] %s381
          %387 = dma.hbm_to_vmem [thread:$0]  %s380, 256, %s382, %s368, 256, 128, 8
        $region48: #{tpu_custom_call.1} parent=39 // pred_fallthru
          _
        // Predicated region
        $region49: #{tpu_custom_call.1} parent=39 // pred_check
          %p388 = pneg %p114
        $region50: #{tpu_custom_call.1} parent=39 // pred_check_branch
          %390 = sbr.rel (%p388) target = $region52
        $region51: #{tpu_custom_call.1} parent=39 // pred_region
          %s391 = sand.u32 %s26, 1
          %s392 = scalar_lea.sflag [#allocation10], %s391
          %s393 = sand.u32 %s104, 1
          %s394 = smul.addr %s393, 16
          %s395 = scalar_lea.vmem [#allocation11], %s394
          %s396 = smul.u32 2, %s33
          %398 = vsyncadd %s392, 0
          %s399 = smul.addr %s396, 2
          %s400 = sadd.s32 %s34, %s399
          %s401 = smul.addr %s400, 8
          %s402 = scalar_lea.hbm %s2, %s401
          %s403 = sshll.u32 %s402, 4
          %s404 = int_to_ptr.hbm [resolvable:$true] %s403
          %s405 = sshll.u32 %s395, 4
          %s406 = int_to_ptr.vmem [resolvable:$true] %s405
          %411 = dma.hbm_to_vmem [thread:$0]  %s404, 256, %s406, %s392, 256, 128, 8
        $region52: #{tpu_custom_call.1} parent=39 // pred_fallthru
          _
      $region40: #{tpu_custom_call.1} parent=5 // pred_fallthru
        _
      %p412 = scmp.le.s32.totalorder 1, %s26
      %p413 = scmp.lt.s32.totalorder %s26, 5
      %p414 = pnand %p412, %p413
      %p415 = pneg %p414
      // Predicated region
      $region53: #{tpu_custom_call.1} parent=5 // pred_check
        _
      $region54: #{tpu_custom_call.1} parent=5 // pred_check_branch
        %417 = sbr.rel (%p414) target = $region56
      $region55: #{tpu_custom_call.1} parent=5 // pred_region
        %s418 = ssub.s32 %s26, 1
        %s419 = sand.u32 %s51, 1
        %s420 = scalar_lea.sflag [#allocation7], %s419
        %s421 = sand.u32 %s51, 1
        %s422 = smul.addr %s421, 16
        %s423 = scalar_lea.vmem [#allocation6], %s422
        // Predicated region
        $region57: #{tpu_custom_call.1} parent=55 // pred_check
          %p424 = pneg %p64
        $region58: #{tpu_custom_call.1} parent=55 // pred_check_branch
          %426 = sbr.rel (%p424) target = $region60
        $region59: #{tpu_custom_call.1} parent=55 // pred_region
          %428 = dma.done %s420, 256
        $region60: #{tpu_custom_call.1} parent=55 // pred_fallthru
          _
        %s429 = sand.u32 %s31, 1
        %s430 = scalar_lea.sflag [#allocation10], %s429
        %s431 = sand.u32 %s79, 1
        %s432 = smul.addr %s431, 16
        %s433 = scalar_lea.vmem [#allocation9], %s432
        // Predicated region
        $region61: #{tpu_custom_call.1} parent=55 // pred_check
          %p434 = pneg %p92
        $region62: #{tpu_custom_call.1} parent=55 // pred_check_branch
          %436 = sbr.rel (%p434) target = $region64
        $region63: #{tpu_custom_call.1} parent=55 // pred_region
          %438 = dma.done %s430, 256
        $region64: #{tpu_custom_call.1} parent=55 // pred_fallthru
          _
        %s439 = sand.u32 %s31, 1
        %s440 = scalar_lea.sflag [#allocation10], %s439
        %s441 = sand.u32 %s107, 1
        %s442 = smul.addr %s441, 16
        %s443 = scalar_lea.vmem [#allocation11], %s442
        // Predicated region
        $region65: #{tpu_custom_call.1} parent=55 // pred_check
          %p444 = pneg %p120
        $region66: #{tpu_custom_call.1} parent=55 // pred_check_branch
          %446 = sbr.rel (%p444) target = $region68
        $region67: #{tpu_custom_call.1} parent=55 // pred_region
          %448 = dma.done %s440, 256
        $region68: #{tpu_custom_call.1} parent=55 // pred_fallthru
          _
        // Predicated region
        $region69: #{tpu_custom_call.1} parent=55 // pred_check
          %p449 = pneg %p141
        $region70: #{tpu_custom_call.1} parent=55 // pred_check_branch
          %451 = sbr.rel (%p449) target = $region72
        $region71: #{tpu_custom_call.1} parent=55 // pred_region
          %453 = dma.done [#allocation13], 256
        $region72: #{tpu_custom_call.1} parent=55 // pred_fallthru
          _
        // Predicated region
        $region73: #{tpu_custom_call.1} parent=55 // pred_check
          %p454 = pneg %p183
        $region74: #{tpu_custom_call.1} parent=55 // pred_check_branch
          %456 = sbr.rel (%p454) target = $region76
        $region75: #{tpu_custom_call.1} parent=55 // pred_region
          %458 = dma.done [#allocation13], 256
        $region76: #{tpu_custom_call.1} parent=55 // pred_fallthru
          _
        // Predicated region
        $region77: #{tpu_custom_call.1} parent=55 // pred_check
          %p459 = pneg %p225
        $region78: #{tpu_custom_call.1} parent=55 // pred_check_branch
          %461 = sbr.rel (%p459) target = $region80
        $region79: #{tpu_custom_call.1} parent=55 // pred_region
          %463 = dma.done [#allocation16], 256
        $region80: #{tpu_custom_call.1} parent=55 // pred_fallthru
          _
        %s464 = sand.u32 %s51, 1
        %s465 = scalar_lea.sflag [#allocation7], %s464
        %s466 = sand.u32 %s51, 1
        %s467 = smul.addr %s466, 16
        %s468 = scalar_lea.vmem [#allocation6], %s467
        %p469 = pneg %p64
        %p470 = pneg %p61
        %s471 = sand.u32 %s31, 1
        %s472 = scalar_lea.sflag [#allocation10], %s471
        %s473 = sand.u32 %s79, 1
        %s474 = smul.addr %s473, 16
        %s475 = scalar_lea.vmem [#allocation9], %s474
        %p476 = pneg %p92
        %p477 = pneg %p89
        %s478 = sand.u32 %s31, 1
        %s479 = scalar_lea.sflag [#allocation10], %s478
        %s480 = sand.u32 %s107, 1
        %s481 = smul.addr %s480, 16
        %s482 = scalar_lea.vmem [#allocation11], %s481
        %p483 = pneg %p120
        %p484 = pneg %p117
        %p485 = pneg %p141
        %p486 = pneg %p138
        %p487 = pneg %p162
        %p488 = pneg %p159
        %p489 = pneg %p183
        %p490 = pneg %p180
        %p491 = pneg %p204
        %p492 = pneg %p201
        %p493 = pneg %p225
        %p494 = pneg %p222
        %p495 = pneg %p246
        %p496 = pneg %p243
        %p497 = pneg %p272
        %p498 = pneg %p269
        %s499 = sand.u32 %s259, 1
        %s500 = scalar_lea.sflag [#allocation8], %s499
        %s501 = sand.u32 %s259, 1
        %s502 = smul.addr %s501, 16
        %s503 = scalar_lea.vmem [#allocation17], %s502
        %s504 = smul.u32 2, %s35
        %s505 = smul.u32 2, %s35
        %s506 = smul.u32 2, %s35
        %s507 = smul.u32 2, %s35
        %p508 = scmp.eq.s32.totalorder %s36, 0
        // Predicated region
        $region81: #{tpu_custom_call.1} parent=55 // pred_check
          %p509 = pneg %p508
        $region82: #{tpu_custom_call.1} parent=55 // pred_check_branch
          %511 = sbr.rel (%p509) target = $region84
        $region83: #{tpu_custom_call.1} parent=55 // pred_region
          %v512 = vld [vmem:[%s423] sm:$0xff]
          %v513 = vld [vmem:[%s423 + $0x8] sm:$0xff]
          %v514 = vld [vmem:[#allocation12] sm:$0xff]
          %v515 = vld [vmem:[#allocation12 + $0x8] sm:$0xff]
          %v516 = vld [vmem:[%s4] sm:$0x1]
          %v518 = vperm.slane %v516, 0
          %vm520 = vcmask 130048
          %v522 = vsel %vm520, %v512, 0
          %v525 = vsel %vm520, %v513, 0
          %527 = vmatpush.msra.mxu0 0.0
          %528 = vmatpush.msra.mxu0 0.0
          %529 = vmatpush.msra.mxu0 0.0
          %530 = vmatpush.msra.mxu0 0.0
          %531 = vmatpush.msra.mxu0 0.0
          %532 = vmatpush.msra.mxu0 0.0
          %533 = vmatpush.msra.mxu0 0.0
          %534 = vmatpush.msra.mxu0 0.0
          %535 = vmatpush.msra.mxu0 0.0
          %536 = vmatpush.msra.mxu0 0.0
          %537 = vmatpush.msra.mxu0 0.0
          %538 = vmatpush.msra.mxu0 0.0
          %539 = vmatpush.msra.mxu0 0.0
          %540 = vmatpush.msra.mxu0 0.0
          %541 = vmatpush.msra.mxu0 %v515
          %542 = vmatpush.msra.mxu0 %v514
          %543 = vmatmul.f32.gmra.mxu0 %v522
          %v544 = vpop.f32.mrf.mxu0
          %v545 = vadd.f32 %v518, %v544
          %546 = vmatmul.f32.gmra.mxu0 %v525
          %v547 = vpop.f32.mrf.mxu0
          %v548 = vadd.f32 %v518, %v547
          %549 = vdwg.mxu0
          %vm550 = vcmask 261120
          %551 = vst.msk [vmem:[#allocation2] sm:$0xff] %vm550, %v545
          %552 = vst.msk [vmem:[#allocation2 + $0x8] sm:$0xff] %vm550, %v548
          %vm553 = vcmask 7168
          %554 = vst.msk [vmem:[#allocation3] sm:$0xff] %vm553, -inf
          %555 = vst.msk [vmem:[#allocation3 + $0x8] sm:$0xff] %vm553, -inf
          %556 = vst.msk [vmem:[#allocation4] sm:$0xff] %vm553, 0.0
          %557 = vst.msk [vmem:[#allocation4 + $0x8] sm:$0xff] %vm553, 0.0
          %558 = vst.msk [vmem:[#allocation5] sm:$0xff] %vm550, 0.0
          %559 = vst.msk [vmem:[#allocation5 + $0x8] sm:$0xff] %vm550, 0.0
        $region84: #{tpu_custom_call.1} parent=55 // pred_fallthru
          _
        %v560 = vld [vmem:[%s433] sm:$0xff]
        %v561 = vld [vmem:[%s433 + $0x8] sm:$0xff]
        %v562 = vld [vmem:[%s443] sm:$0xff]
        %v563 = vld [vmem:[%s443 + $0x8] sm:$0xff]
        %v564 = vld [vmem:[#allocation14] sm:$0xff]
        %v565 = vld [vmem:[#allocation14 + $0x8] sm:$0xff]
        %v566 = vld [vmem:[%s6] sm:$0x1]
        %v568 = vperm.slane %v566, 0
        %vm570 = vcmask 130048
        %v572 = vsel %vm570, %v560, 0
        %v575 = vsel %vm570, %v561, 0
        %577 = vmatpush.msra.mxu0 0.0
        %578 = vmatpush.msra.mxu0 0.0
        %579 = vmatpush.msra.mxu0 0.0
        %580 = vmatpush.msra.mxu0 0.0
        %581 = vmatpush.msra.mxu0 0.0
        %582 = vmatpush.msra.mxu0 0.0
        %583 = vmatpush.msra.mxu0 0.0
        %584 = vmatpush.msra.mxu0 0.0
        %585 = vmatpush.msra.mxu0 0.0
        %586 = vmatpush.msra.mxu0 0.0
        %587 = vmatpush.msra.mxu0 0.0
        %588 = vmatpush.msra.mxu0 0.0
        %589 = vmatpush.msra.mxu0 0.0
        %590 = vmatpush.msra.mxu0 0.0
        %591 = vmatpush.msra.mxu0 %v565
        %592 = vmatpush.msra.mxu0 %v564
        %593 = vmatmul.f32.gmra.mxu0 %v572
        %v594 = vpop.f32.mrf.mxu0
        %v595 = vadd.f32 %v568, %v594
        %596 = vmatmul.f32.gmra.mxu0 %v575
        %v597 = vpop.f32.mrf.mxu0
        %v598 = vadd.f32 %v568, %v597
        %599 = vdwg.mxu0
        %v600 = vld [vmem:[#allocation15] sm:$0xff]
        %v601 = vld [vmem:[#allocation15 + $0x8] sm:$0xff]
        %v602 = vld [vmem:[%s8] sm:$0x1]
        %v604 = vperm.slane %v602, 0
        %v607 = vsel %vm570, %v562, 0
        %v610 = vsel %vm570, %v563, 0
        %612 = vmatpush.msra.mxu0 0.0
        %613 = vmatpush.msra.mxu0 0.0
        %614 = vmatpush.msra.mxu0 0.0
        %615 = vmatpush.msra.mxu0 0.0
        %616 = vmatpush.msra.mxu0 0.0
        %617 = vmatpush.msra.mxu0 0.0
        %618 = vmatpush.msra.mxu0 0.0
        %619 = vmatpush.msra.mxu0 0.0
        %620 = vmatpush.msra.mxu0 0.0
        %621 = vmatpush.msra.mxu0 0.0
        %622 = vmatpush.msra.mxu0 0.0
        %623 = vmatpush.msra.mxu0 0.0
        %624 = vmatpush.msra.mxu0 0.0
        %625 = vmatpush.msra.mxu0 0.0
        %626 = vmatpush.msra.mxu0 %v601
        %627 = vmatpush.msra.mxu0 %v600
        %628 = vmatmul.f32.gmra.mxu0 %v607
        %v629 = vpop.f32.mrf.mxu0
        %v630 = vadd.f32 %v604, %v629
        %631 = vmatmul.f32.gmra.mxu0 %v610
        %v632 = vpop.f32.mrf.mxu0
        %v633 = vadd.f32 %v604, %v632
        %634 = vdwg.mxu0
        %v635 = vld [vmem:[#allocation2] sm:$0xff]
        %v636 = vld [vmem:[#allocation2 + $0x8] sm:$0xff]
        %vm637 = vcmask 261120
        %v639 = vsel %vm637, %v635, 0
        %v642 = vsel %vm637, %v595, 0
        %644 = vmatpush.xpose.msra.mxu0 0.0
        %645 = vmatpush.xpose.msra.mxu0 0.0
        %646 = vmatpush.xpose.msra.mxu0 0.0
        %647 = vmatpush.xpose.msra.mxu0 0.0
        %648 = vmatpush.xpose.msra.mxu0 0.0
        %649 = vmatpush.xpose.msra.mxu0 0.0
        %650 = vmatpush.xpose.msra.mxu0 0.0
        %651 = vmatpush.xpose.msra.mxu0 0.0
        %652 = vmatpush.xpose.msra.mxu0 0.0
        %653 = vmatpush.xpose.msra.mxu0 0.0
        %654 = vmatpush.xpose.msra.mxu0 0.0
        %655 = vmatpush.xpose.msra.mxu0 0.0
        %656 = vmatpush.xpose.msra.mxu0 0.0
        %657 = vmatpush.xpose.msra.mxu0 0.0
        %658 = vmatpush.xpose.msra.mxu0 0.0
        %659 = vmatpush.xpose.msra.mxu0 %v642
        %660 = vmatmul.f32.gmra.mxu0 %v639
        %v661 = vpop.f32.mrf.mxu0
        %v662 = vadd.f32 0.0, %v661
        %663 = vdwg.mxu0
        %v665 = vsel %vm637, %v636, 0
        %v668 = vsel %vm637, %v598, 0
        %670 = vmatpush.xpose.msra.mxu0 0.0
        %671 = vmatpush.xpose.msra.mxu0 0.0
        %672 = vmatpush.xpose.msra.mxu0 0.0
        %673 = vmatpush.xpose.msra.mxu0 0.0
        %674 = vmatpush.xpose.msra.mxu0 0.0
        %675 = vmatpush.xpose.msra.mxu0 0.0
        %676 = vmatpush.xpose.msra.mxu0 0.0
        %677 = vmatpush.xpose.msra.mxu0 0.0
        %678 = vmatpush.xpose.msra.mxu0 0.0
        %679 = vmatpush.xpose.msra.mxu0 0.0
        %680 = vmatpush.xpose.msra.mxu0 0.0
        %681 = vmatpush.xpose.msra.mxu0 0.0
        %682 = vmatpush.xpose.msra.mxu0 0.0
        %683 = vmatpush.xpose.msra.mxu0 0.0
        %684 = vmatpush.xpose.msra.mxu0 0.0
        %685 = vmatpush.xpose.msra.mxu0 %v668
        %686 = vmatmul.f32.gmra.mxu0 %v665
        %v687 = vpop.f32.mrf.mxu0
        %v688 = vadd.f32 0.0, %v687
        %689 = vdwg.mxu0
        %v690 = vld [vmem:[#allocation3] sm:$0xff]
        %v691 = vld [vmem:[#allocation3 + $0x8] sm:$0xff]
        %vm692 = vcmask 64512
        %v693 = vsel %vm692, %v662, -inf
        %694 = vmax.xlane.f32.xlu0 %v693
        %v695 = vpop.xlane.xlu0 %694
        %v696 = vsel %vm692, %v688, -inf
        %697 = vmax.xlane.f32.xlu0 %v696
        %v698 = vpop.xlane.xlu0 %697
        %v699 = vmax.f32 %v690, %v695
        %v700 = vmax.f32 %v691, %v698
        %v701 = vsub.f32 %v690, %v699
        %v702 = vsub.f32 %v691, %v700
        %v703 = vmul.f32 %v701, 1.442695
        %v704 = vpow.pop %v703
        %v705 = vmul.f32 %v702, 1.442695
        %v706 = vpow.pop %v705
        %708 = vset.pattern.permute.xlu0 0
        %709 = vperm.xlu0 %708, %v699
        %v710 = vpop.permute.xlu0 %709
        %713 = vset.pattern.permute.xlu0 0
        %714 = vperm.xlu0 %713, %v700
        %v715 = vpop.permute.xlu0 %714
        %v717 = vsub.f32 %v662, %v710
        %v718 = vsub.f32 %v688, %v715
        %v719 = vmul.f32 %v717, 1.442695
        %v720 = vpow.pop %v719
        %v721 = vmul.f32 %v718, 1.442695
        %v722 = vpow.pop %v721
        %v723 = vld [vmem:[#allocation4] sm:$0xff]
        %v724 = vld [vmem:[#allocation4 + $0x8] sm:$0xff]
        %v725 = vmul.f32 %v704, %v723
        %v726 = vmul.f32 %v706, %v724
        %v727 = vsel %vm692, %v720, 0.0
        %728 = vadd.xlane.f32.xlu0 %v727
        %v729 = vpop.xlane.xlu0 %728
        %v730 = vsel %vm692, %v722, 0.0
        %731 = vadd.xlane.f32.xlu0 %v730
        %v732 = vpop.xlane.xlu0 %731
        %v733 = vadd.f32 %v725, %v729
        %v734 = vadd.f32 %v726, %v732
        %vm735 = vcmask 7168
        %736 = vst.msk [vmem:[#allocation4] sm:$0xff] %vm735, %v733
        %737 = vst.msk [vmem:[#allocation4 + $0x8] sm:$0xff] %vm735, %v734
        %v738 = vld [vmem:[#allocation5] sm:$0xff]
        %v739 = vld [vmem:[#allocation5 + $0x8] sm:$0xff]
        %741 = vset.pattern.permute.xlu0 0
        %742 = vperm.xlu0 %741, %v704
        %v743 = vpop.permute.xlu0 %742
        %746 = vset.pattern.permute.xlu0 0
        %747 = vperm.xlu0 %746, %v706
        %v748 = vpop.permute.xlu0 %747
        %v750 = vmul.f32 %v743, %v738
        %v751 = vmul.f32 %v748, %v739
        %v753 = vsel %vm692, %v720, 0
        %755 = vmatpush.msra.mxu0 0.0
        %756 = vmatpush.msra.mxu0 0.0
        %757 = vmatpush.msra.mxu0 0.0
        %758 = vmatpush.msra.mxu0 0.0
        %759 = vmatpush.msra.mxu0 0.0
        %760 = vmatpush.msra.mxu0 0.0
        %761 = vmatpush.msra.mxu0 0.0
        %762 = vmatpush.msra.mxu0 0.0
        %763 = vmatpush.msra.mxu0 0.0
        %764 = vmatpush.msra.mxu0 0.0
        %765 = vmatpush.msra.mxu0 0.0
        %766 = vmatpush.msra.mxu0 0.0
        %767 = vmatpush.msra.mxu0 0.0
        %768 = vmatpush.msra.mxu0 0.0
        %769 = vmatpush.msra.mxu0 0.0
        %770 = vmatpush.msra.mxu0 %v630
        %771 = vmatmul.f32.gmra.mxu0 %v753
        %v772 = vpop.f32.mrf.mxu0
        %v773 = vadd.f32 0.0, %v772
        %774 = vdwg.mxu0
        %v776 = vsel %vm692, %v722, 0
        %778 = vmatpush.msra.mxu0 0.0
        %779 = vmatpush.msra.mxu0 0.0
        %780 = vmatpush.msra.mxu0 0.0
        %781 = vmatpush.msra.mxu0 0.0
        %782 = vmatpush.msra.mxu0 0.0
        %783 = vmatpush.msra.mxu0 0.0
        %784 = vmatpush.msra.mxu0 0.0
        %785 = vmatpush.msra.mxu0 0.0
        %786 = vmatpush.msra.mxu0 0.0
        %787 = vmatpush.msra.mxu0 0.0
        %788 = vmatpush.msra.mxu0 0.0
        %789 = vmatpush.msra.mxu0 0.0
        %790 = vmatpush.msra.mxu0 0.0
        %791 = vmatpush.msra.mxu0 0.0
        %792 = vmatpush.msra.mxu0 0.0
        %793 = vmatpush.msra.mxu0 %v633
        %794 = vmatmul.f32.gmra.mxu0 %v776
        %v795 = vpop.f32.mrf.mxu0
        %v796 = vadd.f32 0.0, %v795
        %797 = vdwg.mxu0
        %v798 = vadd.f32 %v750, %v773
        %v799 = vadd.f32 %v751, %v796
        %800 = vst.msk [vmem:[#allocation5] sm:$0xff] %vm637, %v798
        %801 = vst.msk [vmem:[#allocation5 + $0x8] sm:$0xff] %vm637, %v799
        %802 = vst.msk [vmem:[#allocation3] sm:$0xff] %vm735, %v699
        %803 = vst.msk [vmem:[#allocation3 + $0x8] sm:$0xff] %vm735, %v700
        %p804 = scmp.eq.s32.totalorder %s36, 1
        // Predicated region
        $region85: #{tpu_custom_call.1} parent=55 // pred_check
          %p805 = pneg %p804
        $region86: #{tpu_custom_call.1} parent=55 // pred_check_branch
          %807 = sbr.rel (%p805) target = $region88
        $region87: #{tpu_custom_call.1} parent=55 // pred_region
          %v808 = vld [vmem:[#allocation4] sm:$0xff]
          %v809 = vld [vmem:[#allocation4 + $0x8] sm:$0xff]
          %v810 = vrcp.pop %v808
          %v811 = vrcp.pop %v809
          %v812 = vld [vmem:[#allocation5] sm:$0xff]
          %v813 = vld [vmem:[#allocation5 + $0x8] sm:$0xff]
          %815 = vset.pattern.permute.xlu0 0
          %816 = vperm.xlu0 %815, %v810
          %v817 = vpop.permute.xlu0 %816
          %820 = vset.pattern.permute.xlu0 0
          %821 = vperm.xlu0 %820, %v811
          %v822 = vpop.permute.xlu0 %821
          %v824 = vmul.f32 %v812, %v817
          %v825 = vmul.f32 %v813, %v822
          %826 = vst.msk [vmem:[%s503] sm:$0xff] %vm637, %v824
          %827 = vst.msk [vmem:[%s503 + $0x8] sm:$0xff] %vm637, %v825
        $region88: #{tpu_custom_call.1} parent=55 // pred_fallthru
          _
        %s828 = sand.u32 %s259, 1
        %s829 = scalar_lea.sflag [#allocation8], %s828
        %s830 = sand.u32 %s259, 1
        %s831 = smul.addr %s830, 16
        %s832 = scalar_lea.vmem [#allocation17], %s831
        // Predicated region
        $region89: #{tpu_custom_call.1} parent=55 // pred_check
          %p833 = pneg %p269
        $region90: #{tpu_custom_call.1} parent=55 // pred_check_branch
          %835 = sbr.rel (%p833) target = $region92
        $region91: #{tpu_custom_call.1} parent=55 // pred_region
          %s836 = smul.u32 2, %s35
          %838 = vsyncadd %s829, 0
          %s839 = smul.addr %s836, 8
          %s840 = scalar_lea.hbm %s9, %s839
          %s841 = sshll.u32 %s832, 4
          %s842 = int_to_ptr.vmem [resolvable:$true] %s841
          %s843 = sshll.u32 %s840, 4
          %s844 = int_to_ptr.hbm [resolvable:$true] %s843
          %849 = dma.vmem_to_hbm [thread:$0]  %s842, 256, %s844, %s829, 128, 128, 8
        $region92: #{tpu_custom_call.1} parent=55 // pred_fallthru
          _
      $region56: #{tpu_custom_call.1} parent=5 // pred_fallthru
        _
      %p850 = scmp.le.s32.totalorder 2, %s26
      // Predicated region
      $region93: #{tpu_custom_call.1} parent=5 // pred_check
        %p851 = pneg %p850
      $region94: #{tpu_custom_call.1} parent=5 // pred_check_branch
        %853 = sbr.rel (%p851) target = $region96
      $region95: #{tpu_custom_call.1} parent=5 // pred_region
        %s854 = ssub.s32 %s26, 2
        // Predicated region
        $region97: #{tpu_custom_call.1} parent=95 // pred_check
          %p855 = pneg %p275
        $region98: #{tpu_custom_call.1} parent=95 // pred_check_branch
          %857 = sbr.rel (%p855) target = $region100
        $region99: #{tpu_custom_call.1} parent=95 // pred_region
          %s858 = sand.u32 %s260, 1
          %s859 = scalar_lea.sflag [#allocation8], %s858
          %s860 = sand.u32 %s260, 1
          %s861 = smul.addr %s860, 16
          %s862 = scalar_lea.vmem [#allocation17], %s861
          %864 = dma.done %s859, 256
        $region100: #{tpu_custom_call.1} parent=95 // pred_fallthru
          _
      $region96: #{tpu_custom_call.1} parent=5 // pred_fallthru
        _
    $region6: #{tpu_custom_call.1} parent=1 // loop_footer
      %s30 = sadd.s32 1, %s26
    $region7: #{tpu_custom_call.1} parent=1 // loop_footer_branch
      %25 = sbr.rel target = $region3
    $region8: #{tpu_custom_call.1} parent=1 // loop_exit
      _
    %865 = vsyncpa [#allocation7], 1
    %s866 = scalar_lea.sflag [#allocation7], 1
    %867 = vsyncpa %s866, 1
    %868 = vsyncpa [#allocation10], 1
    %s869 = scalar_lea.sflag [#allocation10], 1
    %870 = vsyncpa %s869, 1
    %871 = vsyncpa [#allocation13], 1
    %872 = vsyncpa [#allocation16], 1
    %873 = vsyncpa [#allocation8], 1
    %s874 = scalar_lea.sflag [#allocation8], 1
    %875 = vsyncpa %s874, 1

</llo_original>
